<compile_context>
chip_gen: v7x
topology: tpu7x:2x2x1
jax: 0.10.0
libtpu: 0.0.40
codegen_flags: <defaults>
</compile_context>

<pallas_src>
import functools

import jax
import jax.numpy as jnp
from jax.experimental import pallas as pl
from jax.experimental.pallas import tpu as pltpu


def _allgather_kernel(x_hbm, out_hbm, buf, stage_sem, bcast_sem, *, chunks, world):
    """Chunked, double-buffered pure-DMA broadcast.

    For chunk c (rows m0:m0+cm of every source shard):
      HBM x[:, m0:m0+cm, :]  --stage-->  VMEM slot (c & 1)
      VMEM slot              --W DMAs--> out[d, :, m0:m0+cm, :]  for every d
    Chunk c+1's stage overlaps with chunk c's broadcast writes.
    """
    n = len(chunks)

    def stage(ci):
        m0, cm = chunks[ci]
        slot = ci & 1
        return pltpu.make_async_copy(
            x_hbm.at[:, pl.ds(m0, cm), :],
            buf.at[slot, :, pl.ds(0, cm), :],
            stage_sem.at[slot],
        )

    def bcast(ci, d):
        m0, cm = chunks[ci]
        slot = ci & 1
        return pltpu.make_async_copy(
            buf.at[slot, :, pl.ds(0, cm), :],
            out_hbm.at[d, :, pl.ds(m0, cm), :],
            bcast_sem.at[slot, d],
        )

    # Prime the pipeline with the first stage read.
    stage(0).start()

    # TODO(synk): for very large n_chunks (huge M) or very large `world`,
    # switch to a pl.loop with windowed DMA issue to bound unrolled code size
    # and the number of in-flight descriptors.
    for ci in range(n):
        stage(ci).wait()                       # chunk ci is resident in slot ci&1
        for d in range(world):                 # broadcast chunk ci to every dest
            bcast(ci, d).start()
        if ci + 1 < n:
            # Slot (ci+1)&1 == (ci-1)&1: its previous broadcasts (chunk ci-1)
            # must drain before we overwrite the buffer with the next stage.
            if ci >= 1:
                for d in range(world):
                    bcast(ci - 1, d).wait()
            stage(ci + 1).start()              # overlaps with chunk ci's writes

    # Drain the broadcasts of the final one/two chunks.
    for ci in range(max(0, n - 2), n):
        for d in range(world):
            bcast(ci, d).wait()


def allgather(x_shards, *, chunk_bytes_cap=None):
    """All-gather over a simulated world.

    Args:
      x_shards: [W, M, N] array; x_shards[r] is rank r's input `x`.
      chunk_bytes_cap: optional override of the per-chunk staging-buffer size
        in bytes (used to force the multi-chunk pipeline in tests).

    Returns:
      [W, W, M, N] array `out` with out[d, s] == x_shards[s] for all d
      (i.e. rank d's gathered tensor_list, stacked).
    """
    W, M, N = x_shards.shape
    itemsize = jnp.dtype(x_shards.dtype).itemsize
    x_bytes = W * M * N * itemsize
    row_bytes = W * N * itemsize               # one M-row across all ranks

    # Generation-aware VMEM budget (64 MiB/core on v7x, 128 MiB on v5e/v6e).
    try:
        vmem_cap = int(getattr(pltpu.get_tpu_info(), "vmem_capacity_bytes",
                               64 << 20))
    except Exception:  # pragma: no cover - conservative fallback
        vmem_cap = 64 << 20
    budget = max(vmem_cap - (8 << 20), 16 << 20)

    if chunk_bytes_cap is None:
        # Two double-buffer slots + slack must fit the smallest generation.
        chunk_bytes_cap = min(budget // 3, 24 << 20)
    chunk_bytes_cap = max(int(chunk_bytes_cap), row_bytes)
    # TODO(synk): if a single M-row (W*N*itemsize) ever exceeds the cap, chunk
    # over N as well; not needed for realistic shard shapes.

    chunk_m = min(M, max(1, chunk_bytes_cap // row_bytes))
    if chunk_m >= 8:
        chunk_m -= chunk_m % 8                 # keep full chunks sublane-aligned
    chunk_m = max(1, min(chunk_m, M))

    chunks = []
    m0 = 0
    while m0 < M:
        cm = min(chunk_m, M - m0)
        chunks.append((m0, cm))
        m0 += cm

    buf_bytes = 2 * W * chunk_m * N * itemsize
    vmem_limit = max(buf_bytes + (4 << 20), 16 << 20)
    vmem_limit = int(min(vmem_limit,
                         max(vmem_cap - (4 << 20), buf_bytes + (2 << 20))))

    kernel = functools.partial(_allgather_kernel, chunks=tuple(chunks), world=W)

    out = pl.pallas_call(
        kernel,
        out_shape=jax.ShapeDtypeStruct((W, W, M, N), x_shards.dtype),
        # Raw HBM refs; every byte moved is an explicit DMA inside the kernel.
        in_specs=[pl.BlockSpec(memory_space=pl.ANY)],
        out_specs=pl.BlockSpec(memory_space=pl.ANY),
        scratch_shapes=[
            pltpu.VMEM((2, W, chunk_m, N), x_shards.dtype),  # 2 staging slots
            pltpu.SemaphoreType.DMA((2,)),                   # stage sem / slot
            pltpu.SemaphoreType.DMA((2, W)),                 # bcast sem / slot,dest
        ],
        compiler_params=pltpu.CompilerParams(vmem_limit_bytes=vmem_limit),
        cost_estimate=pl.CostEstimate(
            flops=0, transcendentals=0,
            bytes_accessed=int((2 * W + 1) * x_bytes)),
    )(x_shards)
    return out


if __name__ == "__main__":
    key = jax.random.PRNGKey(0)

    # Case 1: small shard set -> single-chunk staging path.
    W, M, N = 4, 16, 256
    x = jax.random.normal(key, (W, M, N), dtype=jnp.float32)
    out = jax.block_until_ready(allgather(x))
    expected = jnp.broadcast_to(x[None], (W, W, M, N))
    assert out.shape == (W, W, M, N)
    assert jnp.array_equal(out, expected)

    # Case 2: force the chunked, double-buffered pipeline (including a ragged
    # tail chunk) by capping the per-chunk staging buffer at 8 rows of M.
    W2, M2, N2 = 4, 20, 256
    x2 = jax.random.normal(jax.random.PRNGKey(0), (W2, M2, N2), dtype=jnp.float32)
    out2 = jax.block_until_ready(
        allgather(x2, chunk_bytes_cap=8 * W2 * N2 * 4))
    expected2 = jnp.broadcast_to(x2[None], (W2, W2, M2, N2))
    assert out2.shape == (W2, W2, M2, N2)
    assert jnp.array_equal(out2, expected2)

    # The module returns `tensor_list` for the calling rank; e.g. rank 0:
    tensor_list_rank0 = [out[0, s] for s in range(W)]
    assert all(t.shape == (M, N) for t in tensor_list_rank0)

    print("KERNEL_OK")
</pallas_src>

<mosaic_0001>
module attributes {stable_mosaic.version = 11 : i64} {
  func.func @_allgather_kernel(%arg0: memref<4x16x256xf32, #tpu.memory_space<any>>, %arg1: memref<4x4x16x256xf32, #tpu.memory_space<any>>, %arg2: memref<2x4x16x256xf32, #tpu.memory_space<vmem>>, %arg3: memref<2x!tpu.dma_semaphore, #tpu.memory_space<semaphore_mem>>, %arg4: memref<2x4x!tpu.dma_semaphore, #tpu.memory_space<semaphore_mem>>) attributes {dimension_semantics = [], scalar_prefetch = 0 : i64, scratch_operands = 3 : i64, tpu.core_type = #tpu.core_type<tc>} {
    %c0_i32 = arith.constant 0 : i32
    %c0_i32_0 = arith.constant 0 : i32
    %c0_i32_1 = arith.constant 0 : i32
    %c0_i32_2 = arith.constant 0 : i32
    %c0_i32_3 = arith.constant 0 : i32
    %0 = tpu.memref_slice %arg0[%c0_i32_1, %c0_i32_2, %c0_i32_3] : memref<4x16x256xf32, #tpu.memory_space<any>> -> memref<4x16x256xf32, #tpu.memory_space<any>>
    %c0_i32_4 = arith.constant 0 : i32
    %c0_i32_5 = arith.constant 0 : i32
    %c0_i32_6 = arith.constant 0 : i32
    %1 = tpu.memref_slice %arg2[%c0_i32, %c0_i32_4, %c0_i32_5, %c0_i32_6] : memref<2x4x16x256xf32, #tpu.memory_space<vmem>> -> memref<1x4x16x256xf32, #tpu.memory_space<vmem>>
    %2 = tpu.memref_squeeze %1 : memref<1x4x16x256xf32, #tpu.memory_space<vmem>> -> memref<4x16x256xf32, #tpu.memory_space<vmem>>
    %3 = tpu.memref_slice %arg3[%c0_i32_0] : memref<2x!tpu.dma_semaphore, #tpu.memory_space<semaphore_mem>> -> memref<1x!tpu.dma_semaphore, #tpu.memory_space<semaphore_mem>>
    %4 = tpu.memref_squeeze %3 : memref<1x!tpu.dma_semaphore, #tpu.memory_space<semaphore_mem>> -> memref<!tpu.dma_semaphore, #tpu.memory_space<semaphore_mem>>
    tpu.enqueue_dma source(%0 : memref<4x16x256xf32, #tpu.memory_space<any>>) target(%2 : memref<4x16x256xf32, #tpu.memory_space<vmem>>) target_semaphore(%4 : memref<!tpu.dma_semaphore, #tpu.memory_space<semaphore_mem>>)
    %c0_i32_7 = arith.constant 0 : i32
    %c0_i32_8 = arith.constant 0 : i32
    %c0_i32_9 = arith.constant 0 : i32
    %c0_i32_10 = arith.constant 0 : i32
    %c0_i32_11 = arith.constant 0 : i32
    %5 = tpu.memref_slice %arg0[%c0_i32_9, %c0_i32_10, %c0_i32_11] : memref<4x16x256xf32, #tpu.memory_space<any>> -> memref<4x16x256xf32, #tpu.memory_space<any>>
    %c0_i32_12 = arith.constant 0 : i32
    %c0_i32_13 = arith.constant 0 : i32
    %c0_i32_14 = arith.constant 0 : i32
    %6 = tpu.memref_slice %arg2[%c0_i32_7, %c0_i32_12, %c0_i32_13, %c0_i32_14] : memref<2x4x16x256xf32, #tpu.memory_space<vmem>> -> memref<1x4x16x256xf32, #tpu.memory_space<vmem>>
    %7 = tpu.memref_squeeze %6 : memref<1x4x16x256xf32, #tpu.memory_space<vmem>> -> memref<4x16x256xf32, #tpu.memory_space<vmem>>
    %8 = tpu.memref_slice %arg3[%c0_i32_8] : memref<2x!tpu.dma_semaphore, #tpu.memory_space<semaphore_mem>> -> memref<1x!tpu.dma_semaphore, #tpu.memory_space<semaphore_mem>>
    %9 = tpu.memref_squeeze %8 : memref<1x!tpu.dma_semaphore, #tpu.memory_space<semaphore_mem>> -> memref<!tpu.dma_semaphore, #tpu.memory_space<semaphore_mem>>
    tpu.wait_dma2 semaphore(%9 : memref<!tpu.dma_semaphore, #tpu.memory_space<semaphore_mem>>) src(%5 : memref<4x16x256xf32, #tpu.memory_space<any>>) dst(%7 : memref<4x16x256xf32, #tpu.memory_space<vmem>>)
    %c0_i32_15 = arith.constant 0 : i32
    %c0_i32_16 = arith.constant 0 : i32
    %c0_i32_17 = arith.constant 0 : i32
    %c0_i32_18 = arith.constant 0 : i32
    %c0_i32_19 = arith.constant 0 : i32
    %c0_i32_20 = arith.constant 0 : i32
    %c0_i32_21 = arith.constant 0 : i32
    %10 = tpu.memref_slice %arg2[%c0_i32_15, %c0_i32_19, %c0_i32_20, %c0_i32_21] : memref<2x4x16x256xf32, #tpu.memory_space<vmem>> -> memref<1x4x16x256xf32, #tpu.memory_space<vmem>>
    %11 = tpu.memref_squeeze %10 : memref<1x4x16x256xf32, #tpu.memory_space<vmem>> -> memref<4x16x256xf32, #tpu.memory_space<vmem>>
    %c0_i32_22 = arith.constant 0 : i32
    %c0_i32_23 = arith.constant 0 : i32
    %c0_i32_24 = arith.constant 0 : i32
    %12 = tpu.memref_slice %arg1[%c0_i32_16, %c0_i32_22, %c0_i32_23, %c0_i32_24] : memref<4x4x16x256xf32, #tpu.memory_space<any>> -> memref<1x4x16x256xf32, #tpu.memory_space<any>>
    %13 = tpu.memref_squeeze %12 : memref<1x4x16x256xf32, #tpu.memory_space<any>> -> memref<4x16x256xf32, #tpu.memory_space<any>>
    %14 = tpu.memref_slice %arg4[%c0_i32_17, %c0_i32_18] : memref<2x4x!tpu.dma_semaphore, #tpu.memory_space<semaphore_mem>> -> memref<1x1x!tpu.dma_semaphore, #tpu.memory_space<semaphore_mem>>
    %15 = tpu.memref_squeeze %14 : memref<1x1x!tpu.dma_semaphore, #tpu.memory_space<semaphore_mem>> -> memref<!tpu.dma_semaphore, #tpu.memory_space<semaphore_mem>>
    tpu.enqueue_dma source(%11 : memref<4x16x256xf32, #tpu.memory_space<vmem>>) target(%13 : memref<4x16x256xf32, #tpu.memory_space<any>>) target_semaphore(%15 : memref<!tpu.dma_semaphore, #tpu.memory_space<semaphore_mem>>)
    %c0_i32_25 = arith.constant 0 : i32
    %c1_i32 = arith.constant 1 : i32
    %c0_i32_26 = arith.constant 0 : i32
    %c1_i32_27 = arith.constant 1 : i32
    %c0_i32_28 = arith.constant 0 : i32
    %c0_i32_29 = arith.constant 0 : i32
    %c0_i32_30 = arith.constant 0 : i32
    %16 = tpu.memref_slice %arg2[%c0_i32_25, %c0_i32_28, %c0_i32_29, %c0_i32_30] : memref<2x4x16x256xf32, #tpu.memory_space<vmem>> -> memref<1x4x16x256xf32, #tpu.memory_space<vmem>>
    %17 = tpu.memref_squeeze %16 : memref<1x4x16x256xf32, #tpu.memory_space<vmem>> -> memref<4x16x256xf32, #tpu.memory_space<vmem>>
    %c0_i32_31 = arith.constant 0 : i32
    %c0_i32_32 = arith.constant 0 : i32
    %c0_i32_33 = arith.constant 0 : i32
    %18 = tpu.memref_slice %arg1[%c1_i32, %c0_i32_31, %c0_i32_32, %c0_i32_33] : memref<4x4x16x256xf32, #tpu.memory_space<any>> -> memref<1x4x16x256xf32, #tpu.memory_space<any>>
    %19 = tpu.memref_squeeze %18 : memref<1x4x16x256xf32, #tpu.memory_space<any>> -> memref<4x16x256xf32, #tpu.memory_space<any>>
    %20 = tpu.memref_slice %arg4[%c0_i32_26, %c1_i32_27] : memref<2x4x!tpu.dma_semaphore, #tpu.memory_space<semaphore_mem>> -> memref<1x1x!tpu.dma_semaphore, #tpu.memory_space<semaphore_mem>>
    %21 = tpu.memref_squeeze %20 : memref<1x1x!tpu.dma_semaphore, #tpu.memory_space<semaphore_mem>> -> memref<!tpu.dma_semaphore, #tpu.memory_space<semaphore_mem>>
    tpu.enqueue_dma source(%17 : memref<4x16x256xf32, #tpu.memory_space<vmem>>) target(%19 : memref<4x16x256xf32, #tpu.memory_space<any>>) target_semaphore(%21 : memref<!tpu.dma_semaphore, #tpu.memory_space<semaphore_mem>>)
    %c0_i32_34 = arith.constant 0 : i32
    %c2_i32 = arith.constant 2 : i32
    %c0_i32_35 = arith.constant 0 : i32
    %c2_i32_36 = arith.constant 2 : i32
    %c0_i32_37 = arith.constant 0 : i32
    %c0_i32_38 = arith.constant 0 : i32
    %c0_i32_39 = arith.constant 0 : i32
    %22 = tpu.memref_slice %arg2[%c0_i32_34, %c0_i32_37, %c0_i32_38, %c0_i32_39] : memref<2x4x16x256xf32, #tpu.memory_space<vmem>> -> memref<1x4x16x256xf32, #tpu.memory_space<vmem>>
    %23 = tpu.memref_squeeze %22 : memref<1x4x16x256xf32, #tpu.memory_space<vmem>> -> memref<4x16x256xf32, #tpu.memory_space<vmem>>
    %c0_i32_40 = arith.constant 0 : i32
    %c0_i32_41 = arith.constant 0 : i32
    %c0_i32_42 = arith.constant 0 : i32
    %24 = tpu.memref_slice %arg1[%c2_i32, %c0_i32_40, %c0_i32_41, %c0_i32_42] : memref<4x4x16x256xf32, #tpu.memory_space<any>> -> memref<1x4x16x256xf32, #tpu.memory_space<any>>
    %25 = tpu.memref_squeeze %24 : memref<1x4x16x256xf32, #tpu.memory_space<any>> -> memref<4x16x256xf32, #tpu.memory_space<any>>
    %26 = tpu.memref_slice %arg4[%c0_i32_35, %c2_i32_36] : memref<2x4x!tpu.dma_semaphore, #tpu.memory_space<semaphore_mem>> -> memref<1x1x!tpu.dma_semaphore, #tpu.memory_space<semaphore_mem>>
    %27 = tpu.memref_squeeze %26 : memref<1x1x!tpu.dma_semaphore, #tpu.memory_space<semaphore_mem>> -> memref<!tpu.dma_semaphore, #tpu.memory_space<semaphore_mem>>
    tpu.enqueue_dma source(%23 : memref<4x16x256xf32, #tpu.memory_space<vmem>>) target(%25 : memref<4x16x256xf32, #tpu.memory_space<any>>) target_semaphore(%27 : memref<!tpu.dma_semaphore, #tpu.memory_space<semaphore_mem>>)
    %c0_i32_43 = arith.constant 0 : i32
    %c3_i32 = arith.constant 3 : i32
    %c0_i32_44 = arith.constant 0 : i32
    %c3_i32_45 = arith.constant 3 : i32
    %c0_i32_46 = arith.constant 0 : i32
    %c0_i32_47 = arith.constant 0 : i32
    %c0_i32_48 = arith.constant 0 : i32
    %28 = tpu.memref_slice %arg2[%c0_i32_43, %c0_i32_46, %c0_i32_47, %c0_i32_48] : memref<2x4x16x256xf32, #tpu.memory_space<vmem>> -> memref<1x4x16x256xf32, #tpu.memory_space<vmem>>
    %29 = tpu.memref_squeeze %28 : memref<1x4x16x256xf32, #tpu.memory_space<vmem>> -> memref<4x16x256xf32, #tpu.memory_space<vmem>>
    %c0_i32_49 = arith.constant 0 : i32
    %c0_i32_50 = arith.constant 0 : i32
    %c0_i32_51 = arith.constant 0 : i32
    %30 = tpu.memref_slice %arg1[%c3_i32, %c0_i32_49, %c0_i32_50, %c0_i32_51] : memref<4x4x16x256xf32, #tpu.memory_space<any>> -> memref<1x4x16x256xf32, #tpu.memory_space<any>>
    %31 = tpu.memref_squeeze %30 : memref<1x4x16x256xf32, #tpu.memory_space<any>> -> memref<4x16x256xf32, #tpu.memory_space<any>>
    %32 = tpu.memref_slice %arg4[%c0_i32_44, %c3_i32_45] : memref<2x4x!tpu.dma_semaphore, #tpu.memory_space<semaphore_mem>> -> memref<1x1x!tpu.dma_semaphore, #tpu.memory_space<semaphore_mem>>
    %33 = tpu.memref_squeeze %32 : memref<1x1x!tpu.dma_semaphore, #tpu.memory_space<semaphore_mem>> -> memref<!tpu.dma_semaphore, #tpu.memory_space<semaphore_mem>>
    tpu.enqueue_dma source(%29 : memref<4x16x256xf32, #tpu.memory_space<vmem>>) target(%31 : memref<4x16x256xf32, #tpu.memory_space<any>>) target_semaphore(%33 : memref<!tpu.dma_semaphore, #tpu.memory_space<semaphore_mem>>)
    %c0_i32_52 = arith.constant 0 : i32
    %c0_i32_53 = arith.constant 0 : i32
    %c0_i32_54 = arith.constant 0 : i32
    %c0_i32_55 = arith.constant 0 : i32
    %c0_i32_56 = arith.constant 0 : i32
    %c0_i32_57 = arith.constant 0 : i32
    %c0_i32_58 = arith.constant 0 : i32
    %34 = tpu.memref_slice %arg2[%c0_i32_52, %c0_i32_56, %c0_i32_57, %c0_i32_58] : memref<2x4x16x256xf32, #tpu.memory_space<vmem>> -> memref<1x4x16x256xf32, #tpu.memory_space<vmem>>
    %35 = tpu.memref_squeeze %34 : memref<1x4x16x256xf32, #tpu.memory_space<vmem>> -> memref<4x16x256xf32, #tpu.memory_space<vmem>>
    %c0_i32_59 = arith.constant 0 : i32
    %c0_i32_60 = arith.constant 0 : i32
    %c0_i32_61 = arith.constant 0 : i32
    %36 = tpu.memref_slice %arg1[%c0_i32_53, %c0_i32_59, %c0_i32_60, %c0_i32_61] : memref<4x4x16x256xf32, #tpu.memory_space<any>> -> memref<1x4x16x256xf32, #tpu.memory_space<any>>
    %37 = tpu.memref_squeeze %36 : memref<1x4x16x256xf32, #tpu.memory_space<any>> -> memref<4x16x256xf32, #tpu.memory_space<any>>
    %38 = tpu.memref_slice %arg4[%c0_i32_54, %c0_i32_55] : memref<2x4x!tpu.dma_semaphore, #tpu.memory_space<semaphore_mem>> -> memref<1x1x!tpu.dma_semaphore, #tpu.memory_space<semaphore_mem>>
    %39 = tpu.memref_squeeze %38 : memref<1x1x!tpu.dma_semaphore, #tpu.memory_space<semaphore_mem>> -> memref<!tpu.dma_semaphore, #tpu.memory_space<semaphore_mem>>
    tpu.wait_dma2 semaphore(%39 : memref<!tpu.dma_semaphore, #tpu.memory_space<semaphore_mem>>) src(%35 : memref<4x16x256xf32, #tpu.memory_space<vmem>>) dst(%37 : memref<4x16x256xf32, #tpu.memory_space<any>>)
    %c0_i32_62 = arith.constant 0 : i32
    %c1_i32_63 = arith.constant 1 : i32
    %c0_i32_64 = arith.constant 0 : i32
    %c1_i32_65 = arith.constant 1 : i32
    %c0_i32_66 = arith.constant 0 : i32
    %c0_i32_67 = arith.constant 0 : i32
    %c0_i32_68 = arith.constant 0 : i32
    %40 = tpu.memref_slice %arg2[%c0_i32_62, %c0_i32_66, %c0_i32_67, %c0_i32_68] : memref<2x4x16x256xf32, #tpu.memory_space<vmem>> -> memref<1x4x16x256xf32, #tpu.memory_space<vmem>>
    %41 = tpu.memref_squeeze %40 : memref<1x4x16x256xf32, #tpu.memory_space<vmem>> -> memref<4x16x256xf32, #tpu.memory_space<vmem>>
    %c0_i32_69 = arith.constant 0 : i32
    %c0_i32_70 = arith.constant 0 : i32
    %c0_i32_71 = arith.constant 0 : i32
    %42 = tpu.memref_slice %arg1[%c1_i32_63, %c0_i32_69, %c0_i32_70, %c0_i32_71] : memref<4x4x16x256xf32, #tpu.memory_space<any>> -> memref<1x4x16x256xf32, #tpu.memory_space<any>>
    %43 = tpu.memref_squeeze %42 : memref<1x4x16x256xf32, #tpu.memory_space<any>> -> memref<4x16x256xf32, #tpu.memory_space<any>>
    %44 = tpu.memref_slice %arg4[%c0_i32_64, %c1_i32_65] : memref<2x4x!tpu.dma_semaphore, #tpu.memory_space<semaphore_mem>> -> memref<1x1x!tpu.dma_semaphore, #tpu.memory_space<semaphore_mem>>
    %45 = tpu.memref_squeeze %44 : memref<1x1x!tpu.dma_semaphore, #tpu.memory_space<semaphore_mem>> -> memref<!tpu.dma_semaphore, #tpu.memory_space<semaphore_mem>>
    tpu.wait_dma2 semaphore(%45 : memref<!tpu.dma_semaphore, #tpu.memory_space<semaphore_mem>>) src(%41 : memref<4x16x256xf32, #tpu.memory_space<vmem>>) dst(%43 : memref<4x16x256xf32, #tpu.memory_space<any>>)
    %c0_i32_72 = arith.constant 0 : i32
    %c2_i32_73 = arith.constant 2 : i32
    %c0_i32_74 = arith.constant 0 : i32
    %c2_i32_75 = arith.constant 2 : i32
    %c0_i32_76 = arith.constant 0 : i32
    %c0_i32_77 = arith.constant 0 : i32
    %c0_i32_78 = arith.constant 0 : i32
    %46 = tpu.memref_slice %arg2[%c0_i32_72, %c0_i32_76, %c0_i32_77, %c0_i32_78] : memref<2x4x16x256xf32, #tpu.memory_space<vmem>> -> memref<1x4x16x256xf32, #tpu.memory_space<vmem>>
    %47 = tpu.memref_squeeze %46 : memref<1x4x16x256xf32, #tpu.memory_space<vmem>> -> memref<4x16x256xf32, #tpu.memory_space<vmem>>
    %c0_i32_79 = arith.constant 0 : i32
    %c0_i32_80 = arith.constant 0 : i32
    %c0_i32_81 = arith.constant 0 : i32
    %48 = tpu.memref_slice %arg1[%c2_i32_73, %c0_i32_79, %c0_i32_80, %c0_i32_81] : memref<4x4x16x256xf32, #tpu.memory_space<any>> -> memref<1x4x16x256xf32, #tpu.memory_space<any>>
    %49 = tpu.memref_squeeze %48 : memref<1x4x16x256xf32, #tpu.memory_space<any>> -> memref<4x16x256xf32, #tpu.memory_space<any>>
    %50 = tpu.memref_slice %arg4[%c0_i32_74, %c2_i32_75] : memref<2x4x!tpu.dma_semaphore, #tpu.memory_space<semaphore_mem>> -> memref<1x1x!tpu.dma_semaphore, #tpu.memory_space<semaphore_mem>>
    %51 = tpu.memref_squeeze %50 : memref<1x1x!tpu.dma_semaphore, #tpu.memory_space<semaphore_mem>> -> memref<!tpu.dma_semaphore, #tpu.memory_space<semaphore_mem>>
    tpu.wait_dma2 semaphore(%51 : memref<!tpu.dma_semaphore, #tpu.memory_space<semaphore_mem>>) src(%47 : memref<4x16x256xf32, #tpu.memory_space<vmem>>) dst(%49 : memref<4x16x256xf32, #tpu.memory_space<any>>)
    %c0_i32_82 = arith.constant 0 : i32
    %c3_i32_83 = arith.constant 3 : i32
    %c0_i32_84 = arith.constant 0 : i32
    %c3_i32_85 = arith.constant 3 : i32
    %c0_i32_86 = arith.constant 0 : i32
    %c0_i32_87 = arith.constant 0 : i32
    %c0_i32_88 = arith.constant 0 : i32
    %52 = tpu.memref_slice %arg2[%c0_i32_82, %c0_i32_86, %c0_i32_87, %c0_i32_88] : memref<2x4x16x256xf32, #tpu.memory_space<vmem>> -> memref<1x4x16x256xf32, #tpu.memory_space<vmem>>
    %53 = tpu.memref_squeeze %52 : memref<1x4x16x256xf32, #tpu.memory_space<vmem>> -> memref<4x16x256xf32, #tpu.memory_space<vmem>>
    %c0_i32_89 = arith.constant 0 : i32
    %c0_i32_90 = arith.constant 0 : i32
    %c0_i32_91 = arith.constant 0 : i32
    %54 = tpu.memref_slice %arg1[%c3_i32_83, %c0_i32_89, %c0_i32_90, %c0_i32_91] : memref<4x4x16x256xf32, #tpu.memory_space<any>> -> memref<1x4x16x256xf32, #tpu.memory_space<any>>
    %55 = tpu.memref_squeeze %54 : memref<1x4x16x256xf32, #tpu.memory_space<any>> -> memref<4x16x256xf32, #tpu.memory_space<any>>
    %56 = tpu.memref_slice %arg4[%c0_i32_84, %c3_i32_85] : memref<2x4x!tpu.dma_semaphore, #tpu.memory_space<semaphore_mem>> -> memref<1x1x!tpu.dma_semaphore, #tpu.memory_space<semaphore_mem>>
    %57 = tpu.memref_squeeze %56 : memref<1x1x!tpu.dma_semaphore, #tpu.memory_space<semaphore_mem>> -> memref<!tpu.dma_semaphore, #tpu.memory_space<semaphore_mem>>
    tpu.wait_dma2 semaphore(%57 : memref<!tpu.dma_semaphore, #tpu.memory_space<semaphore_mem>>) src(%53 : memref<4x16x256xf32, #tpu.memory_space<vmem>>) dst(%55 : memref<4x16x256xf32, #tpu.memory_space<any>>)
    return
  }
}

</mosaic_0001>

<llo_original>
// kernel: tpu_custom_call.1
$region0: #{tpu_custom_call.1}
  #allocation0 [shape = 'u32[]', space=smem, size = 0x4, offset = 0x4, fixed_abs, tag = 'smem constant byte address 0x4 - core index']
  #allocation1 [shape = 'u32[144,128]{1,0:T(1,128)}', space=vmem, size = 0x12000, scoped, tag = 'internal scratch']
  #allocation2 [shape = 'f32[2,4,16,256]{3,2,1,0:T(8,128)}', space=vmem, size = 0x20000, scoped, tag = 'scratch operand']
  #allocation3 [shape = 's32[2]{0}', space=sflag, size = 0x8, scoped, tag = 'scratch operand']
  #allocation4 [shape = 's32[8]{0}', space=sflag, size = 0x20, scoped, tag = 'scratch operand']
  #allocation5 [shape = 's32[]', space=sflag, size = 0x4, offset = 0, fixed_abs, tag = 'sflag constant byte address 0x0 - dummy sync flag']
  #allocation6 [shape = 's32[]', space=sflag, size = 0x4, offset = 0, fixed_abs, tag = 'sflag constant byte address 0x0 - dummy sync flag']
  #allocation7 [shape = 'u32[]', space=smem, size = 0x4, offset = 0x44, fixed_abs, tag = 'smem constant byte address 0x44 - assertion arg 0']
  #allocation8 [shape = 'u32[]', space=smem, size = 0x4, offset = 0x48, fixed_abs, tag = 'smem constant byte address 0x48 - assertion arg 1']
  #allocation9 [shape = 's32[]', space=sflag, size = 0x4, offset = 0, fixed_abs, tag = 'sflag constant byte address 0x0 - dummy sync flag']
  #allocation10 [shape = 's32[]', space=sflag, size = 0x4, offset = 0, fixed_abs, tag = 'sflag constant byte address 0x0 - dummy sync flag']
  #allocation11 [shape = 's32[]', space=sflag, size = 0x4, offset = 0, fixed_abs, tag = 'sflag constant byte address 0x0 - dummy sync flag']
  #allocation12 [shape = 's32[]', space=sflag, size = 0x4, offset = 0, fixed_abs, tag = 'sflag constant byte address 0x0 - dummy sync flag']
  #allocation13 [shape = 's32[]', space=sflag, size = 0x4, offset = 0, fixed_abs, tag = 'sflag constant byte address 0x0 - dummy sync flag']
  #allocation14 [shape = 's32[]', space=sflag, size = 0x4, offset = 0, fixed_abs, tag = 'sflag constant byte address 0x0 - dummy sync flag']
  #allocation15 [shape = 's32[]', space=sflag, size = 0x4, offset = 0, fixed_abs, tag = 'sflag constant byte address 0x0 - dummy sync flag']
  #allocation16 [shape = 's32[]', space=sflag, size = 0x4, offset = 0, fixed_abs, tag = 'sflag constant byte address 0x0 - dummy sync flag']
  %s0 = inlined_call_operand.hbm [shape: f32[4,16,256], index: 0, kind: input, shape index: {}]
  %s1 = inlined_call_operand.hbm [shape: f32[4,4,16,256], index: 1, kind: output, shape index: {}]
  %s2 = sld [smem:[#allocation0]]
  $region22: #{tpu_custom_call.1} parent=0
    _
  %s4 = ssub.s32 1, %s2
  %s5 = scalar_select 0, %s4, %s2
  // Predicated region
  $region2: #{tpu_custom_call.1} parent=0 // pred_check
    _
  $region3: #{tpu_custom_call.1} parent=0 // pred_check_branch
    %7 = sbr.rel target = $region5
  $region4: #{tpu_custom_call.1} parent=0 // pred_region
    %8 = sst [smem:[#allocation7]] [#allocation6]
    %9 = sst [smem:[#allocation8]] [#allocation5]
  $region5: #{tpu_custom_call.1} parent=0 // pred_fallthru
    _
  %11 = shalt.err (0)
  %s13 = sshll.u32 [#allocation2], 4
  %s14 = int_to_ptr.vmem [resolvable:$true] %s13
  %16 = dma.hbm_to_vmem [thread:$0]  %s0, 2048, %s14, [#allocation3]
  %s17 = smul.u32 8, 4
  %s18 = smul.u32 %s17, 2
  %s19 = smul.u32 %s18, 2
  %s20 = sshll.u32 %s19, 4
  %21 = dma.done [#allocation3], %s20
  // Predicated region
  $region6: #{tpu_custom_call.1} parent=0 // pred_check
    _
  $region7: #{tpu_custom_call.1} parent=0 // pred_check_branch
    %23 = sbr.rel target = $region9
  $region8: #{tpu_custom_call.1} parent=0 // pred_region
    %24 = sst [smem:[#allocation7]] [#allocation10]
    %25 = sst [smem:[#allocation8]] [#allocation9]
  $region9: #{tpu_custom_call.1} parent=0 // pred_fallthru
    _
  %27 = shalt.err (0)
  %s29 = sshll.u32 [#allocation2], 4
  %s30 = int_to_ptr.vmem [resolvable:$true] %s29
  %32 = dma.vmem_to_hbm [thread:$0]  %s30, 2048, %s1, [#allocation4]
  %s33 = scalar_lea.hbm %s1, 2048
  %s34 = scalar_lea.sflag [#allocation4], 1
  // Predicated region
  $region10: #{tpu_custom_call.1} parent=0 // pred_check
    _
  $region11: #{tpu_custom_call.1} parent=0 // pred_check_branch
    %36 = sbr.rel target = $region13
  $region12: #{tpu_custom_call.1} parent=0 // pred_region
    %37 = sst [smem:[#allocation7]] [#allocation12]
    %38 = sst [smem:[#allocation8]] [#allocation11]
  $region13: #{tpu_custom_call.1} parent=0 // pred_fallthru
    _
  %40 = shalt.err (0)
  %s42 = sshll.u32 [#allocation2], 4
  %s43 = int_to_ptr.vmem [resolvable:$true] %s42
  %45 = dma.vmem_to_hbm [thread:$0]  %s43, 2048, %s33, %s34
  %s46 = scalar_lea.hbm %s1, 4096
  %s47 = scalar_lea.sflag [#allocation4], 2
  // Predicated region
  $region14: #{tpu_custom_call.1} parent=0 // pred_check
    _
  $region15: #{tpu_custom_call.1} parent=0 // pred_check_branch
    %49 = sbr.rel target = $region17
  $region16: #{tpu_custom_call.1} parent=0 // pred_region
    %50 = sst [smem:[#allocation7]] [#allocation14]
    %51 = sst [smem:[#allocation8]] [#allocation13]
  $region17: #{tpu_custom_call.1} parent=0 // pred_fallthru
    _
  %53 = shalt.err (0)
  %s55 = sshll.u32 [#allocation2], 4
  %s56 = int_to_ptr.vmem [resolvable:$true] %s55
  %58 = dma.vmem_to_hbm [thread:$0]  %s56, 2048, %s46, %s47
  %s59 = scalar_lea.hbm %s1, 6144
  %s60 = scalar_lea.sflag [#allocation4], 3
  // Predicated region
  $region18: #{tpu_custom_call.1} parent=0 // pred_check
    _
  $region19: #{tpu_custom_call.1} parent=0 // pred_check_branch
    %62 = sbr.rel target = $region21
  $region20: #{tpu_custom_call.1} parent=0 // pred_region
    %63 = sst [smem:[#allocation7]] [#allocation16]
    %64 = sst [smem:[#allocation8]] [#allocation15]
  $region21: #{tpu_custom_call.1} parent=0 // pred_fallthru
    _
  %66 = shalt.err (0)
  %s68 = sshll.u32 [#allocation2], 4
  %s69 = int_to_ptr.vmem [resolvable:$true] %s68
  %71 = dma.vmem_to_hbm [thread:$0]  %s69, 2048, %s59, %s60
  %s72 = sshll.u32 %s19, 4
  %73 = dma.done [#allocation4], %s72
  %s74 = sshll.u32 %s19, 4
  %75 = dma.done %s34, %s74
  %s76 = sshll.u32 %s19, 4
  %77 = dma.done %s47, %s76
  %s78 = sshll.u32 %s19, 4
  %79 = dma.done %s60, %s78
  %80 = vsyncmov [#allocation3]
  %s81 = vpop.sfrf %80
  %p82 = scmp.eq.s32.totalorder %s81, 0
  %p83 = pneg %p82
  %85 = shalt.err (%p83)
  %s86 = scalar_lea.sflag [#allocation3], 1
  %87 = vsyncmov %s86
  %s88 = vpop.sfrf %87
  %p89 = scmp.eq.s32.totalorder %s88, 0
  %p90 = pneg %p89
  %92 = shalt.err (%p90)
  %93 = vsyncmov [#allocation4]
  %s94 = vpop.sfrf %93
  %p95 = scmp.eq.s32.totalorder %s94, 0
  %p96 = pneg %p95
  %98 = shalt.err (%p96)
  %s99 = scalar_lea.sflag [#allocation4], 1
  %100 = vsyncmov %s99
  %s101 = vpop.sfrf %100
  %p102 = scmp.eq.s32.totalorder %s101, 0
  %p103 = pneg %p102
  %105 = shalt.err (%p103)
  %s106 = scalar_lea.sflag [#allocation4], 2
  %107 = vsyncmov %s106
  %s108 = vpop.sfrf %107
  %p109 = scmp.eq.s32.totalorder %s108, 0
  %p110 = pneg %p109
  %112 = shalt.err (%p110)
  %s113 = scalar_lea.sflag [#allocation4], 3
  %114 = vsyncmov %s113
  %s115 = vpop.sfrf %114
  %p116 = scmp.eq.s32.totalorder %s115, 0
  %p117 = pneg %p116
  %119 = shalt.err (%p117)
  %s120 = scalar_lea.sflag [#allocation4], 4
  %121 = vsyncmov %s120
  %s122 = vpop.sfrf %121
  %p123 = scmp.eq.s32.totalorder %s122, 0
  %p124 = pneg %p123
  %126 = shalt.err (%p124)
  %s127 = scalar_lea.sflag [#allocation4], 5
  %128 = vsyncmov %s127
  %s129 = vpop.sfrf %128
  %p130 = scmp.eq.s32.totalorder %s129, 0
  %p131 = pneg %p130
  %133 = shalt.err (%p131)
  %s134 = scalar_lea.sflag [#allocation4], 6
  %135 = vsyncmov %s134
  %s136 = vpop.sfrf %135
  %p137 = scmp.eq.s32.totalorder %s136, 0
  %p138 = pneg %p137
  %140 = shalt.err (%p138)
  %s141 = scalar_lea.sflag [#allocation4], 7
  %142 = vsyncmov %s141
  %s143 = vpop.sfrf %142
  %p144 = scmp.eq.s32.totalorder %s143, 0
  %p145 = pneg %p144
  %147 = shalt.err (%p145)

</llo_original>
